<compile_context>
chip_gen: v7x
topology: tpu7x:2x2x1
jax: 0.10.0
libtpu: 0.0.40
codegen_flags: <defaults>
</compile_context>

<pallas_src>
import functools

import jax
import jax.numpy as jnp
from jax.experimental import pallas as pl
from jax.experimental.pallas import tpu as pltpu

_LANE = 128     # last-dim (lane) tile
_SUBLANE = 8    # f32 sublane tile; packed dtypes use 16 (bf16) / 32 (int8, fp8)


def _round_up(n: int, m: int) -> int:
    return ((n + m - 1) // m) * m


def _fcnet_fused_kernel(*refs, num_layers: int, out_dim: int, compute_dtype):
    """Fused MLP. refs = (x, w0, [w_rest], b_stack, out).

    x       : (B_pad, in_dim)            float32, un-padded K
    w0      : (in_dim, Dpad)             compute dtype, zero-padded in N
    w_rest  : (L-1, Dpad, Dpad)          compute dtype, zero-padded (absent if L==1)
    b_stack : (L, 1, Dpad)               float32, zero-padded
    out     : (B_pad, out_dim)           float32

    All operands are whole-array VMEM residents; intermediate activations stay
    in vregs/VMEM and never touch HBM. Zero K-pad rows of each W and zero N-pad
    cols of (W, b) keep every padded activation column exactly 0 end-to-end.
    """
    if num_layers == 1:
        x_ref, w0_ref, b_ref, o_ref = refs
        wrest_ref = None
    else:
        x_ref, w0_ref, wrest_ref, b_ref, o_ref = refs

    # In-kernel cast (VPU) instead of a wrapper-side XLA convert; keeps the
    # wrapper free of extra ops. On the bf16 path this also reduces *input*
    # precision (covered by the 2e-2 tolerance in the checks below).
    h = x_ref[...].astype(compute_dtype)

    for li in range(num_layers):
        w = w0_ref[...] if li == 0 else wrest_ref[li - 1]   # (K, Dpad)
        b = b_ref[li]                                       # (1, Dpad) f32
        # MXU matmul with f32 accumulation; bias add + ReLU on the VPU in f32.
        y = jnp.dot(h, w, preferred_element_type=jnp.float32) + b
        if li < num_layers - 1:
            # TODO(synk): hidden_act/out_act are fixed to FCNet's defaults
            # (F.relu hidden, no output activation); other callables would just
            # swap the jnp op here.
            h = jnp.maximum(y, 0.0).astype(compute_dtype)   # back to MXU dtype
        else:
            # Store the true out_dim lanes directly: one masked store here is
            # far cheaper than an extra XLA slice op around the launch-bound
            # call (output cols beyond out_dim are exactly zero anyway).
            o_ref[...] = y[:, :out_dim].astype(o_ref.dtype)


def init_fcnet_params(key, in_dim, out_dim, hidden_sizes, dtype=jnp.float32):
    """PyTorch nn.Linear-style init. Weight stored transposed: (fan_in, fan_out),
    bias as (1, fan_out). U(-1/sqrt(fan_in), 1/sqrt(fan_in)) like torch default."""
    layer_sizes = [in_dim] + list(hidden_sizes) + [out_dim]
    params = []
    for fan_in, fan_out in zip(layer_sizes, layer_sizes[1:]):
        key, kw, kb = jax.random.split(key, 3)
        bound = float(fan_in) ** -0.5
        w = jax.random.uniform(kw, (fan_in, fan_out), dtype, -bound, bound)
        b = jax.random.uniform(kb, (1, fan_out), dtype, -bound, bound)
        params.append((w, b))
    return params


def pack_fcnet_params(params, compute_dtype=jnp.bfloat16):
    """Pack per-layer (W, b) into the stacked, lane-padded operands the fused
    kernel expects. Layer 0's W keeps K = in_dim (un-padded) so x is passed
    as-is; every other padded dim is zero-filled and rounded to 128 lanes."""
    num_layers = len(params)
    in_dim = params[0][0].shape[0]

    dims = [w.shape[1] for w, _ in params]          # output dims of all layers
    dims += [w.shape[0] for w, _ in params[1:]]     # input dims of layers 1..
    d_pad = max(_round_up(d, _LANE) for d in dims)

    w0_src, _ = params[0]
    w0 = jnp.zeros((in_dim, d_pad), compute_dtype)
    w0 = w0.at[:, : w0_src.shape[1]].set(w0_src.astype(compute_dtype))

    b_stack = jnp.zeros((num_layers, 1, d_pad), jnp.float32)
    for li, (_, b) in enumerate(params):
        b_stack = b_stack.at[li, :, : b.shape[1]].set(b.astype(jnp.float32))

    if num_layers > 1:
        w_rest = jnp.zeros((num_layers - 1, d_pad, d_pad), compute_dtype)
        for li, (w, _) in enumerate(params[1:]):
            w_rest = w_rest.at[li, : w.shape[0], : w.shape[1]].set(
                w.astype(compute_dtype))
    else:
        w_rest = None

    return {"w0": w0, "w_rest": w_rest, "b": b_stack}


def fcnet_forward(x, w0, w_rest, b_stack, *, out_dim):
    """FCNet.forward as ONE fused Pallas call.

    x: (B, in_dim) float32, passed as-is (cast to the MXU dtype in-kernel).
    Returns (B, out_dim) float32.
    """
    num_layers = b_stack.shape[0]
    compute_dtype = w0.dtype
    batch = x.shape[0]

    # Dtype-aware sublane tile: f32 -> 8 rows, bf16 -> 16, int8/fp8 -> 32, so
    # packed-dtype vreg accesses are full tiles (no sub-tile handling).
    itemsize = jnp.dtype(compute_dtype).itemsize
    sublane_tile = _SUBLANE * max(4 // itemsize, 1)
    b_pad = _round_up(batch, sublane_tile)

    x_in = x
    if b_pad != batch:  # only pads when the caller's batch is misaligned
        x_in = jnp.zeros((b_pad, x.shape[1]), x.dtype).at[:batch, :].set(x)

    flat = [x_in, w0] + ([] if w_rest is None else [w_rest]) + [b_stack]

    # Whole-array VMEM placement, no grid -> no pointless double-buffering.
    vmem = pl.BlockSpec(memory_space=pltpu.MemorySpace.VMEM)
    out = pl.pallas_call(
        functools.partial(_fcnet_fused_kernel, num_layers=num_layers,
                          out_dim=out_dim, compute_dtype=compute_dtype),
        out_shape=jax.ShapeDtypeStruct((b_pad, out_dim), jnp.float32),
        in_specs=[vmem] * len(flat),
        out_specs=vmem,
    )(*flat)

    return out if b_pad == batch else out[:batch]


def fcnet_reference(x, params):
    """Pure-JAX f32 reference (matches FCNet defaults: ReLU hidden, no out act)."""
    for w, b in params[:-1]:
        x = jnp.maximum(x @ w + b, 0.0)
    w, b = params[-1]
    return x @ w + b


if __name__ == "__main__":
    key = jax.random.PRNGKey(0)

    # batch=16 is aligned with the bf16 (16,128) packed tile -> zero wrapper
    # pad/slice ops. Real workloads should feed >=128/256 rows per call to
    # amortize the launch (see scaling notes above).
    batch = 16
    in_dim = 32
    hidden_sizes = [64, 32]
    out_dim = 16

    key, kx, kp = jax.random.split(key, 3)
    x = jax.random.normal(kx, (batch, in_dim), jnp.float32)
    params = init_fcnet_params(kp, in_dim, out_dim, hidden_sizes)
    ref = fcnet_reference(x, params)

    fwd = jax.jit(functools.partial(fcnet_forward, out_dim=out_dim))

    # 1) f32 compute path: tight check of the fused/packed kernel structure.
    p32 = pack_fcnet_params(params, jnp.float32)
    out_f32 = jax.block_until_ready(fwd(x, p32["w0"], p32["w_rest"], p32["b"]))
    assert out_f32.shape == (batch, out_dim), out_f32.shape
    assert jnp.allclose(out_f32, ref, atol=1e-4, rtol=1e-4), "f32 mismatch vs reference"

    # 2) bf16 compute path (MXU-native, f32 accumulation; x also cast to bf16
    #    in-kernel): loosened tolerance.
    pbf = pack_fcnet_params(params, jnp.bfloat16)
    out_bf16 = jax.block_until_ready(fwd(x, pbf["w0"], pbf["w_rest"], pbf["b"]))
    assert out_bf16.shape == (batch, out_dim), out_bf16.shape
    assert jnp.allclose(out_bf16, ref, atol=2e-2, rtol=2e-2), "bf16 mismatch vs reference"

    print("KERNEL_OK")
</pallas_src>

<mosaic_0001>
module attributes {stable_mosaic.version = 11 : i64} {
  func.func @_fcnet_fused_kernel(%arg0: memref<16x32xf32, #tpu.memory_space<vmem>>, %arg1: memref<32x128xf32, #tpu.memory_space<vmem>>, %arg2: memref<2x128x128xf32, #tpu.memory_space<vmem>>, %arg3: memref<3x1x128xf32, #tpu.memory_space<vmem>>, %arg4: memref<16x16xf32, #tpu.memory_space<vmem>>) attributes {dimension_semantics = [], scalar_prefetch = 0 : i64, scratch_operands = 0 : i64, tpu.core_type = #tpu.core_type<tc>} {
    %c0 = arith.constant 0 : index
    %c0_0 = arith.constant 0 : index
    %0 = vector.load %arg0[%c0, %c0_0] : memref<16x32xf32, #tpu.memory_space<vmem>>, vector<16x32xf32>
    %c0_1 = arith.constant 0 : index
    %c0_2 = arith.constant 0 : index
    %1 = vector.load %arg1[%c0_1, %c0_2] : memref<32x128xf32, #tpu.memory_space<vmem>>, vector<32x128xf32>
    %c0_3 = arith.constant 0 : index
    %c0_4 = arith.constant 0 : index
    %c0_5 = arith.constant 0 : index
    %2 = vector.load %arg3[%c0_3, %c0_4, %c0_5] : memref<3x1x128xf32, #tpu.memory_space<vmem>>, vector<1x1x128xf32>
    %3 = vector.shape_cast %2 : vector<1x1x128xf32> to vector<1x128xf32>
    %cst = arith.constant dense<0.000000e+00> : vector<16x128xf32>
    %4 = tpu.matmul %0, %1, %cst {dimension_numbers = #tpu.dot_dimension_numbers<[1], [0], [0], [1], [0, 0, 1, 1], [], []>} : vector<16x32xf32>, vector<32x128xf32>, vector<16x128xf32> -> vector<16x128xf32>
    %5 = vector.broadcast %3 : vector<1x128xf32> to vector<16x128xf32>
    %6 = arith.addf %4, %5 : vector<16x128xf32>
    %cst_6 = arith.constant 0.000000e+00 : f32
    %7 = vector.broadcast %cst_6 : f32 to vector<16x128xf32>
    %8 = arith.maximumf %6, %7 : vector<16x128xf32>
    %c0_7 = arith.constant 0 : index
    %c0_8 = arith.constant 0 : index
    %c0_9 = arith.constant 0 : index
    %9 = vector.load %arg2[%c0_7, %c0_8, %c0_9] : memref<2x128x128xf32, #tpu.memory_space<vmem>>, vector<1x128x128xf32>
    %10 = vector.shape_cast %9 : vector<1x128x128xf32> to vector<128x128xf32>
    %c1 = arith.constant 1 : index
    %c0_10 = arith.constant 0 : index
    %c0_11 = arith.constant 0 : index
    %11 = vector.load %arg3[%c1, %c0_10, %c0_11] : memref<3x1x128xf32, #tpu.memory_space<vmem>>, vector<1x1x128xf32>
    %12 = vector.shape_cast %11 : vector<1x1x128xf32> to vector<1x128xf32>
    %cst_12 = arith.constant dense<0.000000e+00> : vector<16x128xf32>
    %13 = tpu.matmul %8, %10, %cst_12 {dimension_numbers = #tpu.dot_dimension_numbers<[1], [0], [0], [1], [0, 0, 1, 1], [], []>} : vector<16x128xf32>, vector<128x128xf32>, vector<16x128xf32> -> vector<16x128xf32>
    %14 = vector.broadcast %12 : vector<1x128xf32> to vector<16x128xf32>
    %15 = arith.addf %13, %14 : vector<16x128xf32>
    %cst_13 = arith.constant 0.000000e+00 : f32
    %16 = vector.broadcast %cst_13 : f32 to vector<16x128xf32>
    %17 = arith.maximumf %15, %16 : vector<16x128xf32>
    %c1_14 = arith.constant 1 : index
    %c0_15 = arith.constant 0 : index
    %c0_16 = arith.constant 0 : index
    %18 = vector.load %arg2[%c1_14, %c0_15, %c0_16] : memref<2x128x128xf32, #tpu.memory_space<vmem>>, vector<1x128x128xf32>
    %19 = vector.shape_cast %18 : vector<1x128x128xf32> to vector<128x128xf32>
    %c2 = arith.constant 2 : index
    %c0_17 = arith.constant 0 : index
    %c0_18 = arith.constant 0 : index
    %20 = vector.load %arg3[%c2, %c0_17, %c0_18] : memref<3x1x128xf32, #tpu.memory_space<vmem>>, vector<1x1x128xf32>
    %21 = vector.shape_cast %20 : vector<1x1x128xf32> to vector<1x128xf32>
    %cst_19 = arith.constant dense<0.000000e+00> : vector<16x128xf32>
    %22 = tpu.matmul %17, %19, %cst_19 {dimension_numbers = #tpu.dot_dimension_numbers<[1], [0], [0], [1], [0, 0, 1, 1], [], []>} : vector<16x128xf32>, vector<128x128xf32>, vector<16x128xf32> -> vector<16x128xf32>
    %23 = vector.broadcast %21 : vector<1x128xf32> to vector<16x128xf32>
    %24 = arith.addf %22, %23 : vector<16x128xf32>
    %25 = vector.extract_strided_slice %24 {offsets = [0, 0], sizes = [16, 16], strides = [1, 1]} : vector<16x128xf32> to vector<16x16xf32>
    %c0_20 = arith.constant 0 : index
    %c0_21 = arith.constant 0 : index
    %26 = vector.load %arg4[%c0_20, %c0_21] : memref<16x16xf32, #tpu.memory_space<vmem>>, vector<16x16xf32>
    tpu.vector_store %arg4[%c0_20, %c0_21], %25 {strides = array<i32>} : memref<16x16xf32, #tpu.memory_space<vmem>>, vector<16x16xf32>,
    return
  }
}

</mosaic_0001>

<llo_original>
// kernel: fcnet_forward.1
$region0: #{fcnet_forward.1}
  #allocation0 [shape = 'u32[]', space=smem, size = 0x4, offset = 0x4, fixed_abs, tag = 'smem constant byte address 0x4 - core index']
  #allocation1 [shape = 'u32[144,128]{1,0:T(1,128)}', space=vmem, size = 0x12000, scoped, tag = 'internal scratch']
  %s0 = inlined_call_operand.hbm [shape: f32[16,32], index: 0, kind: input, shape index: {}]
  %s1 = inlined_call_operand.hbm [shape: f32[32,128], index: 1, kind: input, shape index: {}]
  %s2 = inlined_call_operand.hbm [shape: f32[2,128,128], index: 2, kind: input, shape index: {}]
  %s3 = inlined_call_operand.vmem [shape: f32[3,1,128], index: 3, kind: input, shape index: {}]
  %s4 = inlined_call_operand.hbm [shape: f32[16,16], index: 4, kind: output, shape index: {}]
  %s5 = sld [smem:[#allocation0]]
  $region38: #{fcnet_forward.1} parent=0
    _
  %s7 = ssub.s32 1, %s5
  %s8 = scalar_select 0, %s7, %s5
  $region1: #{fcnet_forward.1} parent=0
    #allocation2 [shape = 'u8[8192]{0}', space=vmem, size = 0x2000, scoped, tag = 'input window, operand 0, single buffered']
    #allocation3 [shape = 's32[1]{0}', space=sflag, size = 0x4, scoped, tag = 'scoped memory for fcnet_forward.1']
    #allocation4 [shape = 's32[1]{0}', space=sflag, size = 0x4, scoped, tag = 'scoped memory for fcnet_forward.1']
    #allocation5 [shape = 'u8[16384]{0}', space=vmem, size = 0x4000, scoped, tag = 'input window, operand 1, single buffered']
    #allocation6 [shape = 's32[1]{0}', space=sflag, size = 0x4, scoped, tag = 'scoped memory for fcnet_forward.1']
    #allocation7 [shape = 'u8[131072]{0}', space=vmem, size = 0x20000, scoped, tag = 'input window, operand 2, single buffered']
    #allocation8 [shape = 'u8[8192]{0}', space=vmem, size = 0x2000, scoped, tag = 'output window, operand 0, single buffered']
    %9 = vsyncpa [#allocation3], 0
    %10 = vsyncpa [#allocation6], 0
    %11 = vsyncpa [#allocation4], 0
    // Predicated region
    $region2: #{fcnet_forward.1} parent=1 // pred_check
      _
    $region3: #{fcnet_forward.1} parent=1 // pred_check_branch
      %13 = sbr.rel (0) target = $region5
    $region4: #{fcnet_forward.1} parent=1 // pred_region
      %s15 = ssub.s32 256, 256
      %16 = vsyncadd [#allocation3], %s15
      %s17 = sshll.u32 [#allocation2], 4
      %s18 = int_to_ptr.vmem [resolvable:$true] %s17
      %23 = dma.hbm_to_vmem [thread:$0]  %s0, 256, %s18, [#allocation3], 128, 128, 8
    $region5: #{fcnet_forward.1} parent=1 // pred_fallthru
      _
    // Predicated region
    $region6: #{fcnet_forward.1} parent=1 // pred_check
      _
    $region7: #{fcnet_forward.1} parent=1 // pred_check_branch
      %25 = sbr.rel (0) target = $region9
    $region8: #{fcnet_forward.1} parent=1 // pred_region
      %s27 = ssub.s32 512, 512
      %28 = vsyncadd [#allocation6], %s27
      %s29 = sshll.u32 [#allocation5], 4
      %s30 = int_to_ptr.vmem [resolvable:$true] %s29
      %35 = dma.hbm_to_vmem [thread:$0]  %s1, 512, %s30, [#allocation6], 128, 128, 8
    $region9: #{fcnet_forward.1} parent=1 // pred_fallthru
      _
    // Predicated region
    $region10: #{fcnet_forward.1} parent=1 // pred_check
      _
    $region11: #{fcnet_forward.1} parent=1 // pred_check_branch
      %37 = sbr.rel (0) target = $region13
    $region12: #{fcnet_forward.1} parent=1 // pred_region
      %s39 = ssub.s32 4096, 4096
      %40 = vsyncadd [#allocation6], %s39
      %s41 = sshll.u32 [#allocation7], 4
      %s42 = int_to_ptr.vmem [resolvable:$true] %s41
      %47 = dma.hbm_to_vmem [thread:$0]  %s2, 4096, %s42, [#allocation6], 128, 128, 8
    $region13: #{fcnet_forward.1} parent=1 // pred_fallthru
      _
    // Predicated region
    $region14: #{fcnet_forward.1} parent=1 // pred_check
      _
    $region15: #{fcnet_forward.1} parent=1 // pred_check_branch
      %49 = sbr.rel (0) target = $region17
    $region16: #{fcnet_forward.1} parent=1 // pred_region
      _
    $region17: #{fcnet_forward.1} parent=1 // pred_fallthru
      _
    // Predicated region
    $region18: #{fcnet_forward.1} parent=1 // pred_check
      _
    $region19: #{fcnet_forward.1} parent=1 // pred_check_branch
      %51 = sbr.rel (0) target = $region21
    $region20: #{fcnet_forward.1} parent=1 // pred_region
      %52 = dma.done [#allocation3], 256
    $region21: #{fcnet_forward.1} parent=1 // pred_fallthru
      _
    // Predicated region
    $region22: #{fcnet_forward.1} parent=1 // pred_check
      _
    $region23: #{fcnet_forward.1} parent=1 // pred_check_branch
      %54 = sbr.rel (0) target = $region25
    $region24: #{fcnet_forward.1} parent=1 // pred_region
      %55 = dma.done [#allocation6], 512
    $region25: #{fcnet_forward.1} parent=1 // pred_fallthru
      _
    // Predicated region
    $region26: #{fcnet_forward.1} parent=1 // pred_check
      _
    $region27: #{fcnet_forward.1} parent=1 // pred_check_branch
      %57 = sbr.rel (0) target = $region29
    $region28: #{fcnet_forward.1} parent=1 // pred_region
      %58 = dma.done [#allocation6], 4096
    $region29: #{fcnet_forward.1} parent=1 // pred_fallthru
      _
    %v59 = vld [vmem:[#allocation2] sm:$0xff]
    %v60 = vld [vmem:[#allocation2 + $0x8] sm:$0xff]
    %v61 = vld [vmem:[#allocation5] sm:$0xff]
    %v62 = vld [vmem:[#allocation5 + $0x8] sm:$0xff]
    %v63 = vld [vmem:[#allocation5 + $0x10] sm:$0xff]
    %v64 = vld [vmem:[#allocation5 + $0x18] sm:$0xff]
    %v65 = vld [vmem:[%s3] sm:$0x1]
    %v67 = vlaneseq
    %v68 = vshrl.u32 %v67, 7
    %v69 = vsub.s32 0, %v68
    %v70 = vrot.slane %v65, %v69
    %vm72 = vcmask 261120
    %v74 = vsel %vm72, %v59, 0
    %v77 = vsel %vm72, %v60, 0
    %79 = vmatprep.subr.mxu0 0.0
    %80 = vmatpush1.msra.mxu0 %v61
    %81 = vmatprep.subr.mxu0 0.0
    %82 = vmatpush1.msra.mxu0 %v62
    %83 = vmatprep.subr.mxu0 0.0
    %84 = vmatpush1.msra.mxu0 %v63
    %85 = vmatprep.subr.mxu0 0.0
    %86 = vmatpush1.msra.mxu0 %v64
    %87 = vmatprep.subr.mxu0 0.0
    %88 = vmatpush1.msra.mxu0 0.0
    %89 = vmatprep.subr.mxu0 0.0
    %90 = vmatpush1.msra.mxu0 0.0
    %91 = vmatprep.subr.mxu0 0.0
    %92 = vmatpush1.msra.mxu0 0.0
    %93 = vmatprep.subr.mxu0 0.0
    %94 = vmatpush1.msra.mxu0 0.0
    %95 = vmatprep.subr.mxu0 0.0
    %96 = vmatpush1.msra.mxu0 0.0
    %97 = vmatprep.subr.mxu0 0.0
    %98 = vmatpush1.msra.mxu0 0.0
    %99 = vmatprep.subr.mxu0 0.0
    %100 = vmatpush1.msra.mxu0 0.0
    %101 = vmatprep.subr.mxu0 0.0
    %102 = vmatpush1.msra.mxu0 0.0
    %103 = vmatprep.subr.mxu0 0.0
    %104 = vmatpush1.msra.mxu0 0.0
    %105 = vmatprep.subr.mxu0 0.0
    %106 = vmatpush1.msra.mxu0 0.0
    %107 = vmatprep.subr.mxu0 0.0
    %108 = vmatpush1.msra.mxu0 0.0
    %109 = vmatprep.subr.mxu0 0.0
    %110 = vmatpush1.msra.mxu0 0.0
    %111 = vmatprep.subr.mxu0 0.0
    %112 = vmatpush1.msra.mxu0 0.0
    %113 = vmatprep.subr.mxu0 0.0
    %114 = vmatpush1.msra.mxu0 0.0
    %115 = vmatprep.subr.mxu0 0.0
    %116 = vmatpush1.msra.mxu0 0.0
    %117 = vmatprep.subr.mxu0 0.0
    %118 = vmatpush1.msra.mxu0 0.0
    %119 = vmatprep.subr.mxu0 0.0
    %120 = vmatpush1.msra.mxu0 0.0
    %121 = vmatprep.subr.mxu0 0.0
    %122 = vmatpush1.msra.mxu0 0.0
    %123 = vmatprep.subr.mxu0 0.0
    %124 = vmatpush1.msra.mxu0 0.0
    %125 = vmatprep.subr.mxu0 0.0
    %126 = vmatpush1.msra.mxu0 0.0
    %127 = vmatprep.subr.mxu0 0.0
    %128 = vmatpush1.msra.mxu0 0.0
    %129 = vmatprep.subr.mxu0 0.0
    %130 = vmatpush1.msra.mxu0 0.0
    %131 = vmatprep.subr.mxu0 0.0
    %132 = vmatpush1.msra.mxu0 0.0
    %133 = vmatprep.subr.mxu0 0.0
    %134 = vmatpush1.msra.mxu0 0.0
    %135 = vmatprep.subr.mxu0 0.0
    %136 = vmatpush1.msra.mxu0 0.0
    %137 = vmatprep.subr.mxu0 0.0
    %138 = vmatpush1.msra.mxu0 0.0
    %139 = vmatprep.subr.mxu0 0.0
    %140 = vmatpush1.msra.mxu0 0.0
    %141 = vmatprep.subr.mxu0 0.0
    %142 = vmatpush1.msra.mxu0 0.0
    %143 = vmatprep.mubr.f32.mxu0 0.0
    %144 = vmatmul.mubr.f32.gmra.mrb[0].mxu0 %v74
    %v145 = vpop.f32.mrb[0].mxu0
    %v146 = vadd.f32 %v70, %v145
    %v147 = vpop.f32.mrb[0].mxu0
    %148 = vmatprep.mubr.f32.mxu0 0.0
    %149 = vmatmul.mubr.f32.gmra.mrb[0].mxu0 %v77
    %v150 = vpop.f32.mrb[0].mxu0
    %v151 = vadd.f32 %v70, %v150
    %v152 = vpop.f32.mrb[0].mxu0
    %153 = vdwg.mxu0
    %v154 = vmax.f32 %v146, 0.0
    %v155 = vmax.f32 %v151, 0.0
    %v156 = vld [vmem:[#allocation7] sm:$0xff]
    %v157 = vld [vmem:[#allocation7 + $0x8] sm:$0xff]
    %v158 = vld [vmem:[#allocation7 + $0x10] sm:$0xff]
    %v159 = vld [vmem:[#allocation7 + $0x18] sm:$0xff]
    %v160 = vld [vmem:[#allocation7 + $0x20] sm:$0xff]
    %v161 = vld [vmem:[#allocation7 + $0x28] sm:$0xff]
    %v162 = vld [vmem:[#allocation7 + $0x30] sm:$0xff]
    %v163 = vld [vmem:[#allocation7 + $0x38] sm:$0xff]
    %v164 = vld [vmem:[#allocation7 + $0x40] sm:$0xff]
    %v165 = vld [vmem:[#allocation7 + $0x48] sm:$0xff]
    %v166 = vld [vmem:[#allocation7 + $0x50] sm:$0xff]
    %v167 = vld [vmem:[#allocation7 + $0x58] sm:$0xff]
    %v168 = vld [vmem:[#allocation7 + $0x60] sm:$0xff]
    %v169 = vld [vmem:[#allocation7 + $0x68] sm:$0xff]
    %v170 = vld [vmem:[#allocation7 + $0x70] sm:$0xff]
    %v171 = vld [vmem:[#allocation7 + $0x78] sm:$0xff]
    %s172 = scalar_lea.vmem %s3, 1
    %v173 = vld [vmem:[%s172] sm:$0x1]
    %v175 = vlaneseq
    %v176 = vshrl.u32 %v175, 7
    %v177 = vsub.s32 0, %v176
    %v178 = vrot.slane %v173, %v177
    %180 = vmatprep.subr.mxu0 0.0
    %181 = vmatpush1.msra.mxu0 %v156
    %182 = vmatprep.subr.mxu0 0.0
    %183 = vmatpush1.msra.mxu0 %v157
    %184 = vmatprep.subr.mxu0 0.0
    %185 = vmatpush1.msra.mxu0 %v158
    %186 = vmatprep.subr.mxu0 0.0
    %187 = vmatpush1.msra.mxu0 %v159
    %188 = vmatprep.subr.mxu0 0.0
    %189 = vmatpush1.msra.mxu0 %v160
    %190 = vmatprep.subr.mxu0 0.0
    %191 = vmatpush1.msra.mxu0 %v161
    %192 = vmatprep.subr.mxu0 0.0
    %193 = vmatpush1.msra.mxu0 %v162
    %194 = vmatprep.subr.mxu0 0.0
    %195 = vmatpush1.msra.mxu0 %v163
    %196 = vmatprep.subr.mxu0 0.0
    %197 = vmatpush1.msra.mxu0 %v164
    %198 = vmatprep.subr.mxu0 0.0
    %199 = vmatpush1.msra.mxu0 %v165
    %200 = vmatprep.subr.mxu0 0.0
    %201 = vmatpush1.msra.mxu0 %v166
    %202 = vmatprep.subr.mxu0 0.0
    %203 = vmatpush1.msra.mxu0 %v167
    %204 = vmatprep.subr.mxu0 0.0
    %205 = vmatpush1.msra.mxu0 %v168
    %206 = vmatprep.subr.mxu0 0.0
    %207 = vmatpush1.msra.mxu0 %v169
    %208 = vmatprep.subr.mxu0 0.0
    %209 = vmatpush1.msra.mxu0 %v170
    %210 = vmatprep.subr.mxu0 0.0
    %211 = vmatpush1.msra.mxu0 %v171
    %212 = vmatprep.subr.mxu0 0.0
    %213 = vmatpush1.msra.mxu0 0.0
    %214 = vmatprep.subr.mxu0 0.0
    %215 = vmatpush1.msra.mxu0 0.0
    %216 = vmatprep.subr.mxu0 0.0
    %217 = vmatpush1.msra.mxu0 0.0
    %218 = vmatprep.subr.mxu0 0.0
    %219 = vmatpush1.msra.mxu0 0.0
    %220 = vmatprep.subr.mxu0 0.0
    %221 = vmatpush1.msra.mxu0 0.0
    %222 = vmatprep.subr.mxu0 0.0
    %223 = vmatpush1.msra.mxu0 0.0
    %224 = vmatprep.subr.mxu0 0.0
    %225 = vmatpush1.msra.mxu0 0.0
    %226 = vmatprep.subr.mxu0 0.0
    %227 = vmatpush1.msra.mxu0 0.0
    %228 = vmatprep.subr.mxu0 0.0
    %229 = vmatpush1.msra.mxu0 0.0
    %230 = vmatprep.subr.mxu0 0.0
    %231 = vmatpush1.msra.mxu0 0.0
    %232 = vmatprep.subr.mxu0 0.0
    %233 = vmatpush1.msra.mxu0 0.0
    %234 = vmatprep.subr.mxu0 0.0
    %235 = vmatpush1.msra.mxu0 0.0
    %236 = vmatprep.subr.mxu0 0.0
    %237 = vmatpush1.msra.mxu0 0.0
    %238 = vmatprep.subr.mxu0 0.0
    %239 = vmatpush1.msra.mxu0 0.0
    %240 = vmatprep.subr.mxu0 0.0
    %241 = vmatpush1.msra.mxu0 0.0
    %242 = vmatprep.subr.mxu0 0.0
    %243 = vmatpush1.msra.mxu0 0.0
    %244 = vmatprep.mubr.f32.mxu0 0.0
    %245 = vmatmul.mubr.f32.gmra.mrb[0].mxu0 %v154
    %v246 = vpop.f32.mrb[0].mxu0
    %v247 = vadd.f32 %v178, %v246
    %v248 = vpop.f32.mrb[0].mxu0
    %249 = vmatprep.mubr.f32.mxu0 0.0
    %250 = vmatmul.mubr.f32.gmra.mrb[0].mxu0 %v155
    %v251 = vpop.f32.mrb[0].mxu0
    %v252 = vadd.f32 %v178, %v251
    %v253 = vpop.f32.mrb[0].mxu0
    %254 = vdwg.mxu0
    %v255 = vmax.f32 %v247, 0.0
    %v256 = vmax.f32 %v252, 0.0
    %s257 = scalar_lea.vmem [#allocation7], 128
    %v258 = vld [vmem:[%s257] sm:$0xff]
    %v259 = vld [vmem:[%s257 + $0x8] sm:$0xff]
    %v260 = vld [vmem:[%s257 + $0x10] sm:$0xff]
    %v261 = vld [vmem:[%s257 + $0x18] sm:$0xff]
    %v262 = vld [vmem:[%s257 + $0x20] sm:$0xff]
    %v263 = vld [vmem:[%s257 + $0x28] sm:$0xff]
    %v264 = vld [vmem:[%s257 + $0x30] sm:$0xff]
    %v265 = vld [vmem:[%s257 + $0x38] sm:$0xff]
    %v266 = vld [vmem:[%s257 + $0x40] sm:$0xff]
    %v267 = vld [vmem:[%s257 + $0x48] sm:$0xff]
    %v268 = vld [vmem:[%s257 + $0x50] sm:$0xff]
    %v269 = vld [vmem:[%s257 + $0x58] sm:$0xff]
    %v270 = vld [vmem:[%s257 + $0x60] sm:$0xff]
    %v271 = vld [vmem:[%s257 + $0x68] sm:$0xff]
    %v272 = vld [vmem:[%s257 + $0x70] sm:$0xff]
    %v273 = vld [vmem:[%s257 + $0x78] sm:$0xff]
    %s274 = scalar_lea.vmem %s3, 2
    %v275 = vld [vmem:[%s274] sm:$0x1]
    %v277 = vlaneseq
    %v278 = vshrl.u32 %v277, 7
    %v279 = vsub.s32 0, %v278
    %v280 = vrot.slane %v275, %v279
    %282 = vmatprep.subr.mxu0 0.0
    %283 = vmatpush1.msra.mxu0 %v258
    %284 = vmatprep.subr.mxu0 0.0
    %285 = vmatpush1.msra.mxu0 %v259
    %286 = vmatprep.subr.mxu0 0.0
    %287 = vmatpush1.msra.mxu0 %v260
    %288 = vmatprep.subr.mxu0 0.0
    %289 = vmatpush1.msra.mxu0 %v261
    %290 = vmatprep.subr.mxu0 0.0
    %291 = vmatpush1.msra.mxu0 %v262
    %292 = vmatprep.subr.mxu0 0.0
    %293 = vmatpush1.msra.mxu0 %v263
    %294 = vmatprep.subr.mxu0 0.0
    %295 = vmatpush1.msra.mxu0 %v264
    %296 = vmatprep.subr.mxu0 0.0
    %297 = vmatpush1.msra.mxu0 %v265
    %298 = vmatprep.subr.mxu0 0.0
    %299 = vmatpush1.msra.mxu0 %v266
    %300 = vmatprep.subr.mxu0 0.0
    %301 = vmatpush1.msra.mxu0 %v267
    %302 = vmatprep.subr.mxu0 0.0
    %303 = vmatpush1.msra.mxu0 %v268
    %304 = vmatprep.subr.mxu0 0.0
    %305 = vmatpush1.msra.mxu0 %v269
    %306 = vmatprep.subr.mxu0 0.0
    %307 = vmatpush1.msra.mxu0 %v270
    %308 = vmatprep.subr.mxu0 0.0
    %309 = vmatpush1.msra.mxu0 %v271
    %310 = vmatprep.subr.mxu0 0.0
    %311 = vmatpush1.msra.mxu0 %v272
    %312 = vmatprep.subr.mxu0 0.0
    %313 = vmatpush1.msra.mxu0 %v273
    %314 = vmatprep.subr.mxu0 0.0
    %315 = vmatpush1.msra.mxu0 0.0
    %316 = vmatprep.subr.mxu0 0.0
    %317 = vmatpush1.msra.mxu0 0.0
    %318 = vmatprep.subr.mxu0 0.0
    %319 = vmatpush1.msra.mxu0 0.0
    %320 = vmatprep.subr.mxu0 0.0
    %321 = vmatpush1.msra.mxu0 0.0
    %322 = vmatprep.subr.mxu0 0.0
    %323 = vmatpush1.msra.mxu0 0.0
    %324 = vmatprep.subr.mxu0 0.0
    %325 = vmatpush1.msra.mxu0 0.0
    %326 = vmatprep.subr.mxu0 0.0
    %327 = vmatpush1.msra.mxu0 0.0
    %328 = vmatprep.subr.mxu0 0.0
    %329 = vmatpush1.msra.mxu0 0.0
    %330 = vmatprep.subr.mxu0 0.0
    %331 = vmatpush1.msra.mxu0 0.0
    %332 = vmatprep.subr.mxu0 0.0
    %333 = vmatpush1.msra.mxu0 0.0
    %334 = vmatprep.subr.mxu0 0.0
    %335 = vmatpush1.msra.mxu0 0.0
    %336 = vmatprep.subr.mxu0 0.0
    %337 = vmatpush1.msra.mxu0 0.0
    %338 = vmatprep.subr.mxu0 0.0
    %339 = vmatpush1.msra.mxu0 0.0
    %340 = vmatprep.subr.mxu0 0.0
    %341 = vmatpush1.msra.mxu0 0.0
    %342 = vmatprep.subr.mxu0 0.0
    %343 = vmatpush1.msra.mxu0 0.0
    %344 = vmatprep.subr.mxu0 0.0
    %345 = vmatpush1.msra.mxu0 0.0
    %346 = vmatprep.mubr.f32.mxu0 0.0
    %347 = vmatmul.mubr.f32.gmra.mrb[0].mxu0 %v255
    %v348 = vpop.f32.mrb[0].mxu0
    %v349 = vadd.f32 %v280, %v348
    %v350 = vpop.f32.mrb[0].mxu0
    %351 = vmatprep.mubr.f32.mxu0 0.0
    %352 = vmatmul.mubr.f32.gmra.mrb[0].mxu0 %v256
    %v353 = vpop.f32.mrb[0].mxu0
    %v354 = vadd.f32 %v280, %v353
    %v355 = vpop.f32.mrb[0].mxu0
    %356 = vdwg.mxu0
    %vm357 = vcmask 130048
    %358 = vst.msk [vmem:[#allocation8] sm:$0xff] %vm357, %v349
    %359 = vst.msk [vmem:[#allocation8 + $0x8] sm:$0xff] %vm357, %v354
    // Predicated region
    $region30: #{fcnet_forward.1} parent=1 // pred_check
      _
    $region31: #{fcnet_forward.1} parent=1 // pred_check_branch
      %361 = sbr.rel (0) target = $region33
    $region32: #{fcnet_forward.1} parent=1 // pred_region
      %s363 = ssub.s32 256, 256
      %364 = vsyncadd [#allocation4], %s363
      %s365 = sshll.u32 [#allocation8], 4
      %s366 = int_to_ptr.vmem [resolvable:$true] %s365
      %371 = dma.vmem_to_hbm [thread:$0]  %s366, 256, %s4, [#allocation4], 128, 128, 8
    $region33: #{fcnet_forward.1} parent=1 // pred_fallthru
      _
    // Predicated region
    $region34: #{fcnet_forward.1} parent=1 // pred_check
      _
    $region35: #{fcnet_forward.1} parent=1 // pred_check_branch
      %373 = sbr.rel (0) target = $region37
    $region36: #{fcnet_forward.1} parent=1 // pred_region
      %374 = dma.done [#allocation4], 256
    $region37: #{fcnet_forward.1} parent=1 // pred_fallthru
      _
    %375 = vsyncpa [#allocation3], 1
    %376 = vsyncpa [#allocation6], 1
    %377 = vsyncpa [#allocation4], 1

</llo_original>
